<compile_context>
chip_gen: v7x
topology: tpu7x:2x2x1
jax: 0.10.0
libtpu: 0.0.40
codegen_flags: <defaults>
</compile_context>

<pallas_src>
import math

import numpy as np
import jax
import jax.numpy as jnp
from jax.experimental import pallas as pl
from jax.experimental.pallas import tpu as pltpu


def _round_up(v, m):
    return ((v + m - 1) // m) * m


def _pad_and_tile(dim, base, max_tile):
    """Pad `dim` up to a multiple of `base`, pick a tile <= max_tile, and
    re-pad so the tile divides the padded size."""
    padded = _round_up(dim, base)
    tile = min(padded, max_tile)
    padded = _round_up(padded, tile)
    return padded, tile


# --------------------------------------------------------------------------
# Pallas kernel: bf16 MXU matmul over an N-reduction grid + fused affine
# --------------------------------------------------------------------------
def mngraph_agg_kernel(a_ref, x_ref, wb_ref, agg_ref, acc_ref):
    # grid = (K tiles [parallel], S tiles [parallel], N tiles [reduction, last])
    n = pl.program_id(2)

    @pl.when(n == 0)
    def _():
        acc_ref[...] = jnp.zeros_like(acc_ref)

    # One bf16 MXU pass per (k, s, n) tile: [tk, tn] @ [tn, ts], f32 accumulate.
    acc_ref[...] += jnp.dot(a_ref[...], x_ref[...],
                            preferred_element_type=jnp.float32)

    @pl.when(n == pl.num_programs(2) - 1)
    def _():
        # Affine applied AFTER the matmul on the tiny [tk, ts] result: exact
        # because every real row of A sums to 1.  Padded rows -> pure bias
        # (sliced off by the wrapper).
        agg_ref[...] = acc_ref[...] * wb_ref[0:1, :] + wb_ref[1:2, :]


def mngraph_agg_pallas(x, w1, b1, A_np, *, n_pad, tn, s_pad, ts, k_pad, tk):
    """x: [N, S] f32; A_np: np.float32 [K_pad, N_pad] mean-weight matrix.
    Returns agg = (A @ x) * W1 + B1 as [K_pad, S_pad] f32."""
    N, S = x.shape
    bf16, f32 = jnp.bfloat16, jnp.float32

    # bf16 MXU operands (single cast+pad pass), f32 accumulation inside.
    x_p = jnp.pad(x.astype(bf16), ((0, n_pad - N), (0, s_pad - S)))
    a_p = jnp.asarray(A_np, dtype=bf16)          # single host->device copy
    wb_p = jnp.pad(jnp.stack([w1, b1]).astype(f32),
                   ((0, 0), (0, s_pad - S)))     # [W1 ; B1] -> (2, S_pad)

    grid = (k_pad // tk, s_pad // ts, n_pad // tn)

    # Explicit VMEM budget (double-buffered bf16 inputs + f32 acc/output),
    # capped at 48 MiB so the same config fits v7x's 64 MiB physical VMEM.
    est = (2 * tk * tn * 2          # A double-buffer (bf16)
           + 2 * tn * ts * 2        # x double-buffer (bf16)
           + 2 * 8 * ts * 4         # [W1;B1] block (sublane-padded)
           + 2 * tk * ts * 4        # output double-buffer (f32)
           + tk * ts * 4)           # accumulator scratch
    vmem_limit = int(min(max(2 * est, 32 * 1024 * 1024), 48 * 1024 * 1024))

    grid_spec = pltpu.PrefetchScalarGridSpec(
        num_scalar_prefetch=0,
        grid=grid,
        in_specs=[
            # NOTE: A's index_map ignores s; with ts<=512 small feature dims
            # collapse to a single S tile so A streams from HBM exactly once.
            pl.BlockSpec((tk, tn), lambda k, s, n: (k, n)),    # A (bf16)
            pl.BlockSpec((tn, ts), lambda k, s, n: (n, s)),    # x (bf16)
            pl.BlockSpec((2, ts), lambda k, s, n: (0, s)),     # [W1 ; B1]
        ],
        out_specs=pl.BlockSpec((tk, ts), lambda k, s, n: (k, s)),
        scratch_shapes=[pltpu.VMEM((tk, ts), jnp.float32)],
    )
    # NOTE: pipeline_mode=pl.Buffered(3) on the A / x specs is a further
    # tuning knob once per-step compute is short; left at default depth here.
    agg = pl.pallas_call(
        mngraph_agg_kernel,
        out_shape=jax.ShapeDtypeStruct((k_pad, s_pad), f32),
        grid_spec=grid_spec,
        compiler_params=pltpu.CompilerParams(
            dimension_semantics=("parallel", "parallel", "arbitrary"),
            vmem_limit_bytes=vmem_limit),
    )(a_p, x_p, wb_p)
    return agg


# --------------------------------------------------------------------------
# Host-side replication of the data-dependent graph contraction loop
# --------------------------------------------------------------------------
def _degree(idx, num_nodes):
    d = np.zeros(num_nodes, dtype=np.float64)
    np.add.at(d, idx, 1.0)
    return d


def coarsen_graph(edge_index, num_nodes):
    """Replicates the PyTorch while-loop: greedy high-degree node selection,
    neighbour contraction, self-loop removal, reverse-edge completion, and the
    final searchsorted remapping of edge indices."""
    ei = np.asarray(edge_index, dtype=np.int64).copy()
    deg = _degree(ei[1], num_nodes) + _degree(ei[0], num_nodes)
    visits = np.zeros(num_nodes, dtype=bool)
    others = np.argsort(-deg, kind="stable")
    select, neighbour_sets = [], []
    while others.size > 0:
        node = int(others[0])
        select.append(node)
        visits[node] = True
        H = np.unique(np.concatenate([ei[1][ei[0] == node], ei[0][ei[1] == node]]))
        visits[H] = True
        others = others[~visits[others]]
        # contract: rewire edges of not-yet-selected neighbours onto `node`
        to_merge = H[~np.isin(H, np.asarray(select, dtype=np.int64))]
        ei[np.isin(ei, to_merge)] = node
        ei = ei[:, ei[0] != ei[1]]                      # drop self loops
        r = ei[::-1].copy()                             # reversed edges
        if ei.shape[1] > 0:
            eq = (r[:, :, None] == ei[:, None, :]).all(axis=0)
            ei = np.concatenate([ei, r[:, ~eq.any(axis=1)]], axis=1)
        neighbour_sets.append(H.astype(np.int64))
    sort = np.sort(np.asarray(select, dtype=np.int64))
    new_ei = np.stack([np.searchsorted(sort, ei[0]),
                       np.searchsorted(sort, ei[1])], axis=0)
    return select, neighbour_sets, new_ei


def build_cluster_matrix(select, neighbour_sets, k_pad, n_pad):
    """Build the mean-weight matrix A (f32 [K_pad, N_pad]) and the selection
    gather indices (int32 [K]).  Stale rows (empty H, as in the reference
    module) copy the previous row / index so stale chains stay exact."""
    K = len(select)
    A = np.zeros((k_pad, n_pad), dtype=np.float32)
    sel_idx = np.zeros((K,), dtype=np.int32)
    for k, (node, H) in enumerate(zip(select, neighbour_sets)):
        if H.size == 0:
            if k == 0:
                raise ValueError("first selected node has no neighbours "
                                 "(undefined M in the reference module)")
            A[k] = A[k - 1]
            sel_idx[k] = sel_idx[k - 1]
        else:
            A[k, H] = 1.0 / float(H.size)
            sel_idx[k] = node
    return A, sel_idx


# --------------------------------------------------------------------------
# MNGRAPH module (params + forward)
# --------------------------------------------------------------------------
def init_mngraph_params(key, S):
    k1, k2 = jax.random.split(key)
    bound = math.sqrt(6.0 / (S + 1))     # xavier_uniform_ on a (1, S) view
    return {
        "W1": jax.random.uniform(k1, (S,), jnp.float32, -bound, bound),
        "W2": jax.random.uniform(k2, (S,), jnp.float32, -bound, bound),
        "B1": jnp.zeros((S,), jnp.float32),
        "B2": jnp.zeros((S,), jnp.float32),
    }


def mngraph_forward(params, x, edge_index):
    N, S = x.shape
    select, nbrs, new_ei = coarsen_graph(np.asarray(edge_index), N)
    K = len(select)

    # Tile / padding selection (bigger tiles amortize per-grid-step overhead;
    # tk<=256 keeps the LHS buffer bounded and gives a K-parallel axis).
    n_pad, tn = _pad_and_tile(N, 128, 1024)
    s_pad, ts = _pad_and_tile(S, 128, 512)
    k_pad, tk = _pad_and_tile(K, 8, 256)

    A, sel_idx = build_cluster_matrix(select, nbrs, k_pad, n_pad)

    # Hot path: mean-aggregation matmul on the MXU.
    agg = mngraph_agg_pallas(x, params["W1"], params["B1"], A,
                             n_pad=n_pad, tn=tn, s_pad=s_pad, ts=ts,
                             k_pad=k_pad, tk=tk)

    # Selection half: tiny K-row gather (no dense one-hot matmul needed).
    sel = x[jnp.asarray(sel_idx)] * params["W2"] + params["B2"]

    # END row k = concat([ x[NODE_k]*W2+B2 , mean_{n in H_k}(x[n]*W1+B1) ])
    end = jnp.concatenate([sel, agg[:K, :S]], axis=1)
    return end, jnp.asarray(new_ei, dtype=jnp.int32)


if __name__ == "__main__":
    key = jax.random.PRNGKey(0)
    kx, kp = jax.random.split(key)

    N, S = 10, 7                                   # MNGRAPH(7): feature dim 7
    x = jax.random.normal(kx, (N, S), jnp.float32)
    edge_index = jnp.array(
        [[0, 1, 2, 3, 4, 5, 6, 7, 8, 0, 2, 4],
         [1, 2, 3, 4, 5, 6, 7, 8, 9, 5, 7, 9]], dtype=jnp.int32)

    params = init_mngraph_params(kp, S)
    end, new_ei = mngraph_forward(params, x, edge_index)
    jax.block_until_ready(end)
    jax.block_until_ready(new_ei)
    assert end.shape[1] == 2 * S
    print("KERNEL_OK")
</pallas_src>

<mosaic_0001>
module attributes {stable_mosaic.version = 11 : i64} {
  func.func @mngraph_agg_kernel(%arg0: i32, %arg1: i32, %arg2: i32, %arg3: memref<8x128xbf16, #tpu.memory_space<vmem>>, %arg4: memref<128x128xbf16, #tpu.memory_space<vmem>>, %arg5: memref<2x128xf32, #tpu.memory_space<vmem>>, %arg6: memref<8x128xf32, #tpu.memory_space<vmem>>, %arg7: memref<8x128xf32, #tpu.memory_space<vmem>>) attributes {dimension_semantics = [#tpu.dimension_semantics<parallel>, #tpu.dimension_semantics<parallel>, #tpu.dimension_semantics<arbitrary>], iteration_bounds = array<i64: 1, 1, 1>, scalar_prefetch = 0 : i64, scratch_operands = 1 : i64, tpu.core_type = #tpu.core_type<tc>, window_params = [{transform_indices = @transform_0, window_bounds = array<i64: 8, 128>}, {transform_indices = @transform_1, window_bounds = array<i64: 128, 128>}, {transform_indices = @transform_2, window_bounds = array<i64: 2, 128>}, {transform_indices = @transform_3, window_bounds = array<i64: 8, 128>}]} {
    %c0_i32 = arith.constant 0 : i32
    %0 = arith.cmpi eq, %arg2, %c0_i32 : i32
    %1 = arith.extui %0 : i1 to i32
    %c0_i32_0 = arith.constant 0 : i32
    %2 = arith.cmpi ne, %1, %c0_i32_0 : i32
    scf.if %2 {
      %cst_10 = arith.constant 0.000000e+00 : f32
      %12 = vector.broadcast %cst_10 : f32 to vector<8x128xf32>
      %c0_11 = arith.constant 0 : index
      %c0_12 = arith.constant 0 : index
      %13 = vector.load %arg7[%c0_11, %c0_12] : memref<8x128xf32, #tpu.memory_space<vmem>>, vector<8x128xf32>
      tpu.vector_store %arg7[%c0_11, %c0_12], %12 {strides = array<i32>} : memref<8x128xf32, #tpu.memory_space<vmem>>, vector<8x128xf32>,
    } else {
    }
    %c0 = arith.constant 0 : index
    %c0_1 = arith.constant 0 : index
    %3 = vector.load %arg7[%c0, %c0_1] : memref<8x128xf32, #tpu.memory_space<vmem>>, vector<8x128xf32>
    %c0_2 = arith.constant 0 : index
    %c0_3 = arith.constant 0 : index
    %4 = vector.load %arg3[%c0_2, %c0_3] : memref<8x128xbf16, #tpu.memory_space<vmem>>, vector<8x128xbf16>
    %c0_4 = arith.constant 0 : index
    %c0_5 = arith.constant 0 : index
    %5 = vector.load %arg4[%c0_4, %c0_5] : memref<128x128xbf16, #tpu.memory_space<vmem>>, vector<128x128xbf16>
    %cst = arith.constant dense<0.000000e+00> : vector<8x128xf32>
    %6 = tpu.matmul %4, %5, %cst {dimension_numbers = #tpu.dot_dimension_numbers<[1], [0], [0], [1], [0, 0, 1, 1], [], []>} : vector<8x128xbf16>, vector<128x128xbf16>, vector<8x128xf32> -> vector<8x128xf32>
    %7 = arith.addf %3, %6 : vector<8x128xf32>
    %c0_6 = arith.constant 0 : index
    %c0_7 = arith.constant 0 : index
    %8 = vector.load %arg7[%c0_6, %c0_7] : memref<8x128xf32, #tpu.memory_space<vmem>>, vector<8x128xf32>
    tpu.vector_store %arg7[%c0_6, %c0_7], %7 {strides = array<i32>} : memref<8x128xf32, #tpu.memory_space<vmem>>, vector<8x128xf32>,
    %c0_i32_8 = arith.constant 0 : i32
    %9 = arith.cmpi eq, %arg2, %c0_i32_8 : i32
    %10 = arith.extui %9 : i1 to i32
    %c0_i32_9 = arith.constant 0 : i32
    %11 = arith.cmpi ne, %10, %c0_i32_9 : i32
    scf.if %11 {
      %c0_10 = arith.constant 0 : index
      %c0_11 = arith.constant 0 : index
      %12 = vector.load %arg7[%c0_10, %c0_11] : memref<8x128xf32, #tpu.memory_space<vmem>>, vector<8x128xf32>
      %c0_12 = arith.constant 0 : index
      %c0_13 = arith.constant 0 : index
      %13 = vector.load %arg5[%c0_12, %c0_13] : memref<2x128xf32, #tpu.memory_space<vmem>>, vector<1x128xf32>
      %14 = vector.broadcast %13 : vector<1x128xf32> to vector<8x128xf32>
      %15 = arith.mulf %12, %14 : vector<8x128xf32>
      %c1 = arith.constant 1 : index
      %c0_14 = arith.constant 0 : index
      %16 = vector.load %arg5[%c1, %c0_14] : memref<2x128xf32, #tpu.memory_space<vmem>>, vector<1x128xf32>
      %17 = vector.broadcast %16 : vector<1x128xf32> to vector<8x128xf32>
      %18 = arith.addf %15, %17 : vector<8x128xf32>
      %c0_15 = arith.constant 0 : index
      %c0_16 = arith.constant 0 : index
      %19 = vector.load %arg6[%c0_15, %c0_16] : memref<8x128xf32, #tpu.memory_space<vmem>>, vector<8x128xf32>
      tpu.vector_store %arg6[%c0_15, %c0_16], %18 {strides = array<i32>} : memref<8x128xf32, #tpu.memory_space<vmem>>, vector<8x128xf32>,
    } else {
    }
    return
  }
  func.func @transform_0(%arg0: i32, %arg1: i32, %arg2: i32) -> (i32, i32) {
    %c0_i32 = arith.constant 0 : i32
    return %arg0, %arg2 : i32, i32
  }
  func.func @transform_1(%arg0: i32, %arg1: i32, %arg2: i32) -> (i32, i32) {
    %c0_i32 = arith.constant 0 : i32
    return %arg2, %arg1 : i32, i32
  }
  func.func @transform_2(%arg0: i32, %arg1: i32, %arg2: i32) -> (i32, i32) {
    %c0_i32 = arith.constant 0 : i32
    %c0_i32_0 = arith.constant 0 : i32
    return %c0_i32, %arg1 : i32, i32
  }
  func.func @transform_3(%arg0: i32, %arg1: i32, %arg2: i32) -> (i32, i32) {
    %c0_i32 = arith.constant 0 : i32
    return %arg0, %arg1 : i32, i32
  }
}

</mosaic_0001>

<llo_original>
// kernel: tpu_custom_call.1
$region0: #{tpu_custom_call.1}
  #allocation0 [shape = 'u32[]', space=smem, size = 0x4, offset = 0x4, fixed_abs, tag = 'smem constant byte address 0x4 - core index']
  #allocation1 [shape = 'u32[144,128]{1,0:T(1,128)}', space=vmem, size = 0x12000, scoped, tag = 'internal scratch']
  #allocation2 [shape = 'f32[8,128]{1,0:T(8,128)}', space=vmem, size = 0x1000, scoped, tag = 'scratch operand']
  %s0 = inlined_call_operand.hbm [shape: bf16[8,128], index: 0, kind: input, shape index: {}]
  %s1 = inlined_call_operand.hbm [shape: bf16[128,128], index: 1, kind: input, shape index: {}]
  %s2 = inlined_call_operand.vmem [shape: f32[2,128], index: 2, kind: input, shape index: {}]
  %s3 = inlined_call_operand.hbm [shape: f32[8,128], index: 3, kind: output, shape index: {}]
  %s4 = sld [smem:[#allocation0]]
  $region38: #{tpu_custom_call.1} parent=0
    _
  %s6 = ssub.s32 1, %s4
  %s7 = scalar_select 0, %s6, %s4
  $region1: #{tpu_custom_call.1} parent=0
    #allocation3 [shape = 'u8[2048]{0}', space=vmem, size = 0x800, scoped, tag = 'input window, operand 0, single buffered']
    #allocation4 [shape = 's32[1]{0}', space=sflag, size = 0x4, scoped, tag = 'scoped memory for tpu_custom_call.1']
    #allocation5 [shape = 's32[1]{0}', space=sflag, size = 0x4, scoped, tag = 'scoped memory for tpu_custom_call.1']
    #allocation6 [shape = 'u8[32768]{0}', space=vmem, size = 0x8000, scoped, tag = 'input window, operand 1, single buffered']
    #allocation7 [shape = 's32[1]{0}', space=sflag, size = 0x4, scoped, tag = 'scoped memory for tpu_custom_call.1']
    #allocation8 [shape = 'u8[4096]{0}', space=vmem, size = 0x1000, scoped, tag = 'output window, operand 0, single buffered']
    %8 = vsyncpa [#allocation4], 0
    %9 = vsyncpa [#allocation7], 0
    %10 = vsyncpa [#allocation5], 0
    // Predicated region
    $region2: #{tpu_custom_call.1} parent=1 // pred_check
      _
    $region3: #{tpu_custom_call.1} parent=1 // pred_check_branch
      %12 = sbr.rel (0) target = $region5
    $region4: #{tpu_custom_call.1} parent=1 // pred_region
      %s14 = ssub.s32 64, 64
      %15 = vsyncadd [#allocation4], %s14
      %s17 = sshll.u32 [#allocation3], 4
      %s18 = int_to_ptr.vmem [resolvable:$true] %s17
      %20 = dma.hbm_to_vmem [thread:$0]  %s0, 64, %s18, [#allocation4]
    $region5: #{tpu_custom_call.1} parent=1 // pred_fallthru
      _
    // Predicated region
    $region6: #{tpu_custom_call.1} parent=1 // pred_check
      _
    $region7: #{tpu_custom_call.1} parent=1 // pred_check_branch
      %22 = sbr.rel (0) target = $region9
    $region8: #{tpu_custom_call.1} parent=1 // pred_region
      %s24 = ssub.s32 1024, 1024
      %25 = vsyncadd [#allocation7], %s24
      %s26 = sshll.u32 [#allocation6], 4
      %s27 = int_to_ptr.vmem [resolvable:$true] %s26
      %32 = dma.hbm_to_vmem [thread:$0]  %s1, 1024, %s27, [#allocation7], 64, 64, 4
    $region9: #{tpu_custom_call.1} parent=1 // pred_fallthru
      _
    // Predicated region
    $region10: #{tpu_custom_call.1} parent=1 // pred_check
      _
    $region11: #{tpu_custom_call.1} parent=1 // pred_check_branch
      %34 = sbr.rel (0) target = $region13
    $region12: #{tpu_custom_call.1} parent=1 // pred_region
      _
    $region13: #{tpu_custom_call.1} parent=1 // pred_fallthru
      _
    // Predicated region
    $region14: #{tpu_custom_call.1} parent=1 // pred_check
      _
    $region15: #{tpu_custom_call.1} parent=1 // pred_check_branch
      %36 = sbr.rel (0) target = $region17
    $region16: #{tpu_custom_call.1} parent=1 // pred_region
      %37 = dma.done [#allocation4], 64
    $region17: #{tpu_custom_call.1} parent=1 // pred_fallthru
      _
    // Predicated region
    $region18: #{tpu_custom_call.1} parent=1 // pred_check
      _
    $region19: #{tpu_custom_call.1} parent=1 // pred_check_branch
      %39 = sbr.rel (0) target = $region21
    $region20: #{tpu_custom_call.1} parent=1 // pred_region
      %40 = dma.done [#allocation7], 1024
    $region21: #{tpu_custom_call.1} parent=1 // pred_fallthru
      _
    %p42 = scmp.eq.s32.totalorder 0, 0
    // Predicated region
    $region22: #{tpu_custom_call.1} parent=1 // pred_check
      %p43 = pneg %p42
    $region23: #{tpu_custom_call.1} parent=1 // pred_check_branch
      %45 = sbr.rel (%p43) target = $region25
    $region24: #{tpu_custom_call.1} parent=1 // pred_region
      %46 = vst [vmem:[#allocation2] sm:$0xff] 0.0
    $region25: #{tpu_custom_call.1} parent=1 // pred_fallthru
      _
    %v47 = vld [vmem:[#allocation2] sm:$0xff]
    %v48 = vld [vmem:[#allocation3] sm:$0xf]
    %v49 = vld [vmem:[#allocation6] sm:$0xf]
    %v50 = vld [vmem:[#allocation6 + $0x4] sm:$0xf]
    %v51 = vld [vmem:[#allocation6 + $0x8] sm:$0xf]
    %v52 = vld [vmem:[#allocation6 + $0xc] sm:$0xf]
    %v53 = vld [vmem:[#allocation6 + $0x10] sm:$0xf]
    %v54 = vld [vmem:[#allocation6 + $0x14] sm:$0xf]
    %v55 = vld [vmem:[#allocation6 + $0x18] sm:$0xf]
    %v56 = vld [vmem:[#allocation6 + $0x1c] sm:$0xf]
    %v57 = vld [vmem:[#allocation6 + $0x20] sm:$0xf]
    %v58 = vld [vmem:[#allocation6 + $0x24] sm:$0xf]
    %v59 = vld [vmem:[#allocation6 + $0x28] sm:$0xf]
    %v60 = vld [vmem:[#allocation6 + $0x2c] sm:$0xf]
    %v61 = vld [vmem:[#allocation6 + $0x30] sm:$0xf]
    %v62 = vld [vmem:[#allocation6 + $0x34] sm:$0xf]
    %v63 = vld [vmem:[#allocation6 + $0x38] sm:$0xf]
    %v64 = vld [vmem:[#allocation6 + $0x3c] sm:$0xf]
    %v81 = vunpack.c.l.b16 %v49
    %v82 = vunpack.c.l.b16 %v50
    %v83 = vunpack.c.l.b16 %v51
    %v84 = vunpack.c.l.b16 %v52
    %v85 = vunpack.c.l.b16 %v53
    %v86 = vunpack.c.l.b16 %v54
    %v87 = vunpack.c.l.b16 %v55
    %v88 = vunpack.c.l.b16 %v56
    %v89 = vunpack.c.l.b16 %v57
    %v90 = vunpack.c.l.b16 %v58
    %v91 = vunpack.c.l.b16 %v59
    %v92 = vunpack.c.l.b16 %v60
    %v93 = vunpack.c.l.b16 %v61
    %v94 = vunpack.c.l.b16 %v62
    %v95 = vunpack.c.l.b16 %v63
    %v96 = vunpack.c.l.b16 %v64
    %v97 = vpack.c.b16 %v82, %v81
    %v98 = vpack.c.b16 %v84, %v83
    %v99 = vpack.c.b16 %v86, %v85
    %v100 = vpack.c.b16 %v88, %v87
    %v101 = vpack.c.b16 %v90, %v89
    %v102 = vpack.c.b16 %v92, %v91
    %v103 = vpack.c.b16 %v94, %v93
    %v104 = vpack.c.b16 %v96, %v95
    %113 = vmatprep.subr.bf16.mxu0 0
    %114 = vmatpush1.bf16.msra.mxu0 %v97
    %115 = vmatprep.subr.bf16.mxu0 0
    %116 = vmatpush1.bf16.msra.mxu0 %v98
    %117 = vmatprep.subr.bf16.mxu0 0
    %118 = vmatpush1.bf16.msra.mxu0 %v99
    %119 = vmatprep.subr.bf16.mxu0 0
    %120 = vmatpush1.bf16.msra.mxu0 %v100
    %121 = vmatprep.subr.bf16.mxu0 0
    %122 = vmatpush1.bf16.msra.mxu0 %v101
    %123 = vmatprep.subr.bf16.mxu0 0
    %124 = vmatpush1.bf16.msra.mxu0 %v102
    %125 = vmatprep.subr.bf16.mxu0 0
    %126 = vmatpush1.bf16.msra.mxu0 %v103
    %127 = vmatprep.subr.bf16.mxu0 0
    %128 = vmatpush1.bf16.msra.mxu0 %v104
    %129 = vmatprep.subr.bf16.mxu0 0
    %130 = vmatpush1.bf16.msra.mxu0 0
    %131 = vmatprep.subr.bf16.mxu0 0
    %132 = vmatpush1.bf16.msra.mxu0 0
    %133 = vmatprep.subr.bf16.mxu0 0
    %134 = vmatpush1.bf16.msra.mxu0 0
    %135 = vmatprep.subr.bf16.mxu0 0
    %136 = vmatpush1.bf16.msra.mxu0 0
    %137 = vmatprep.subr.bf16.mxu0 0
    %138 = vmatpush1.bf16.msra.mxu0 0
    %139 = vmatprep.subr.bf16.mxu0 0
    %140 = vmatpush1.bf16.msra.mxu0 0
    %141 = vmatprep.subr.bf16.mxu0 0
    %142 = vmatpush1.bf16.msra.mxu0 0
    %143 = vmatprep.subr.bf16.mxu0 0
    %144 = vmatpush1.bf16.msra.mxu0 0
    %145 = vmatprep.mubr.bf16.mxu0 0
    %146 = vmatmul.mubr.bf16.gmra.mrb[0].mxu0 %v48
    %v147 = vpop.f32.mrb[0].mxu0
    %v148 = vadd.f32 0.0, %v147
    %v149 = vpop.f32.mrb[0].mxu0
    %v150 = vpop.f32.mrb[0].mxu0
    %v151 = vpop.f32.mrb[0].mxu0
    %152 = vdwg.mxu0
    %v153 = vadd.f32 %v47, %v148
    %154 = vst [vmem:[#allocation2] sm:$0xff] %v153
    // Predicated region
    $region26: #{tpu_custom_call.1} parent=1 // pred_check
      %p155 = pneg %p42
    $region27: #{tpu_custom_call.1} parent=1 // pred_check_branch
      %157 = sbr.rel (%p155) target = $region29
    $region28: #{tpu_custom_call.1} parent=1 // pred_region
      %v158 = vld [vmem:[#allocation2] sm:$0xff]
      %v159 = vld [vmem:[%s2] sm:$0x1]
      %v160 = vlaneseq
      %v161 = vshrl.u32 %v160, 7
      %v162 = vsub.s32 0, %v161
      %v163 = vrot.slane %v159, %v162
      %v164 = vmul.f32 %v158, %v163
      %v165 = vld [vmem:[%s2 + $0x1] sm:$0x1]
      %v166 = vlaneseq
      %v167 = vshrl.u32 %v166, 7
      %v168 = vsub.s32 0, %v167
      %v169 = vrot.slane %v165, %v168
      %v170 = vadd.f32 %v164, %v169
      %171 = vst [vmem:[#allocation8] sm:$0xff] %v170
    $region29: #{tpu_custom_call.1} parent=1 // pred_fallthru
      _
    // Predicated region
    $region30: #{tpu_custom_call.1} parent=1 // pred_check
      _
    $region31: #{tpu_custom_call.1} parent=1 // pred_check_branch
      %173 = sbr.rel (0) target = $region33
    $region32: #{tpu_custom_call.1} parent=1 // pred_region
      %s175 = ssub.s32 128, 128
      %176 = vsyncadd [#allocation5], %s175
      %s178 = sshll.u32 [#allocation8], 4
      %s179 = int_to_ptr.vmem [resolvable:$true] %s178
      %181 = dma.vmem_to_hbm [thread:$0]  %s179, 128, %s3, [#allocation5]
    $region33: #{tpu_custom_call.1} parent=1 // pred_fallthru
      _
    // Predicated region
    $region34: #{tpu_custom_call.1} parent=1 // pred_check
      _
    $region35: #{tpu_custom_call.1} parent=1 // pred_check_branch
      %183 = sbr.rel (0) target = $region37
    $region36: #{tpu_custom_call.1} parent=1 // pred_region
      %184 = dma.done [#allocation5], 128
    $region37: #{tpu_custom_call.1} parent=1 // pred_fallthru
      _
    %185 = vsyncpa [#allocation4], 1
    %186 = vsyncpa [#allocation7], 1
    %187 = vsyncpa [#allocation5], 1

</llo_original>
